<compile_context>
chip_gen: v5e
topology: v5e:2x2
jax: 0.10.0
libtpu: 0.0.40
codegen_flags: <defaults>
</compile_context>

<pallas_src>
import functools

import jax
import jax.numpy as jnp
import numpy as np
from jax import lax
from jax.experimental import pallas as pl
from jax.experimental.pallas import tpu as pltpu


def _round_up(x, m):
    return ((x + m - 1) // m) * m


def _next_pow2(x):
    return 1 if x <= 1 else 1 << (int(x) - 1).bit_length()


# ----------------------------------------------------------------------------
# Kernel 1: PPmodel MLP (BN/bias pre-folded), tiled over points.
# ----------------------------------------------------------------------------
def _ppmodel_kernel(x_ref, w1_ref, b1_ref, w2_ref, b2_ref, w3_ref, b3_ref,
                    w4_ref, b4_ref, o_ref):
    h = jnp.dot(x_ref[...], w1_ref[...], preferred_element_type=jnp.float32) + b1_ref[...]
    h = jnp.maximum(h, 0.0).astype(jnp.bfloat16)
    h = jnp.dot(h, w2_ref[...], preferred_element_type=jnp.float32) + b2_ref[...]
    h = jnp.maximum(h, 0.0).astype(jnp.bfloat16)
    h = jnp.dot(h, w3_ref[...], preferred_element_type=jnp.float32) + b3_ref[...]
    h = jnp.maximum(h, 0.0).astype(jnp.bfloat16)
    h = jnp.dot(h, w4_ref[...], preferred_element_type=jnp.float32) + b4_ref[...]
    o_ref[...] = h.astype(o_ref.dtype)


def ppmodel_forward(x, folded, tile_n=2048, bucket_tiles=4):
    """x: [N, fea_dim] f32. Returns bf16 [N, 64] (true out_pt_fea_dim, no pad)."""
    n, fin = x.shape
    fin_pad = folded[0].shape[0]          # 8
    out_dim = folded[-2].shape[1]         # 64 (real channel count)
    # Bucket the tile count (recompile guard for streaming point counts).
    num_tiles = _round_up(max(1, pl.cdiv(max(n, 1), tile_n)), bucket_tiles)
    n_pad = num_tiles * tile_n
    xp = jnp.pad(x.astype(jnp.bfloat16), ((0, n_pad - n), (0, fin_pad - fin)))

    param_specs = [pl.BlockSpec(p.shape, lambda i: (0, 0)) for p in folded]
    out = pl.pallas_call(
        _ppmodel_kernel,
        out_shape=jax.ShapeDtypeStruct((n_pad, out_dim), jnp.bfloat16),
        grid_spec=pltpu.PrefetchScalarGridSpec(
            num_scalar_prefetch=0,
            grid=(num_tiles,),
            in_specs=[pl.BlockSpec((tile_n, fin_pad), lambda i: (i, 0))] + param_specs,
            out_specs=pl.BlockSpec((tile_n, out_dim), lambda i: (i, 0)),
        ),
        compiler_params=pltpu.CompilerParams(
            dimension_semantics=("parallel",),
            vmem_limit_bytes=32 * 1024 * 1024),   # well under v7x's 64 MiB/TC
    )(xp, *folded)
    return out[:n]


# ----------------------------------------------------------------------------
# Roll-direction probe: one tiny kernel, cached.  Lets us run a forward-only
# segmented scan (7 rolls, no id-column rolls) while staying correct for either
# hardware rotate convention.
# ----------------------------------------------------------------------------
_ROLL_DIR = {}


def _roll_pulls_from_earlier():
    """True iff pltpu.roll(x, s, axis=0)[i] == x[i - s] (jnp.roll convention)."""
    if "v" not in _ROLL_DIR:
        def _probe(o_ref):
            col = lax.broadcasted_iota(jnp.int32, (8, 128), 0)
            o_ref[...] = pltpu.roll(col, 1, axis=0)

        out = pl.pallas_call(
            _probe, out_shape=jax.ShapeDtypeStruct((8, 128), jnp.int32))()
        _ROLL_DIR["v"] = bool(int(out[0, 0]) == 7)
    return _ROLL_DIR["v"]


# ----------------------------------------------------------------------------
# Kernel 2: scatter_max (segment max) over SORTED, DENSE segment ids.
#
# Wrapper guarantees: ids are dense 0..num_seg-1 with >=1 point each (true for
# unq_inv from jnp.unique) and points are sorted by id, so every 128-point
# sub-tile touches a contiguous id window of width <= 135 starting at an
# 8-aligned, in-bounds base.
# ----------------------------------------------------------------------------
P_SUB = 128          # points per sub-tile (sublane scan unit)
WIN = P_SUB + 8      # output window per sub-tile (8-aligned base)


def _scatter_max_kernel(k_sub, bases_ref, sidx_ref, dist_ref, feat_ref, o_ref):
    core = pl.program_id(0)
    step = pl.program_id(1)
    spc = pl.num_programs(1)

    @pl.when(step == 0)
    def _init():
        o_ref[...] = jnp.full(o_ref.shape, -jnp.inf, o_ref.dtype)

    sub0 = (core * spc + step) * k_sub
    u_idx = lax.broadcasted_iota(jnp.int32, (WIN, P_SUB), 0)

    def body(j, carry):
        r0 = pl.multiple_of(j * P_SUB, P_SUB)
        val = feat_ref[pl.ds(r0, P_SUB), :]          # (128, C) bf16 (max exact in bf16)
        dist = dist_ref[pl.ds(r0, P_SUB), :]         # (128, 1) int32: same-run reach

        # Forward-only segmented max scan (Hillis-Steele): 7 doubling steps,
        # mask = VPU compare of the precomputed reach column vs the scalar
        # shift (no id/rank rolls).  Keep val bf16 all the way (halves XLU work
        # vs f32; v5e unpacks but stays correct).
        sh = 1
        while sh < P_SUB:
            v_sh = pltpu.roll(val, sh, axis=0)
            val = jnp.where(dist >= sh, jnp.maximum(val, v_sh), val)
            sh *= 2

        # One representative row per tile-local run scatters its run max into
        # the 8-aligned window of the resident accumulator via a bf16 one-hot
        # MXU matmul (exact: 0/1 x bf16 values, f32 accumulation).
        sidx = sidx_ref[j]                           # (1, 128) int32; -1 = no scatter
        eq = u_idx == sidx                           # (WIN, 128)
        onehot = eq.astype(jnp.bfloat16)
        contrib = jnp.dot(onehot, val, preferred_element_type=jnp.float32)   # (WIN, C)
        present = jnp.max(eq.astype(jnp.float32), axis=1, keepdims=True) > 0.0
        contrib = jnp.where(present, contrib, -jnp.inf)

        b = pl.multiple_of(bases_ref[sub0 + j], 8)   # clamped in-bounds by the wrapper
        cur = o_ref[pl.ds(b, WIN), :]
        o_ref[pl.ds(b, WIN), :] = jnp.maximum(cur, contrib)
        return carry

    lax.fori_loop(0, k_sub, body, 0, unroll=True)


def scatter_max_sorted(feat_sorted, inv_sorted, num_seg, *, k_sub=8, num_cores=1,
                       bucket_steps=4):
    """Segment max over points SORTED by dense segment id (0..num_seg-1, every
    id occupied, e.g. the inverse index from jnp.unique).  feat_sorted: [N, C]
    (C == 64 here), any float dtype (cast to bf16).  Returns f32 [num_seg, C].

    num_cores=2 adds a leading 'parallel' grid axis (one accumulator per
    TensorCore, combined with jnp.maximum) -> ~2x on v7x / megacore parts."""
    n, cdim = feat_sorted.shape
    inv = inv_sorted.reshape(-1).astype(jnp.int32)

    pts_per_step = k_sub * P_SUB
    steps_total = _round_up(max(1, pl.cdiv(max(n, 1), pts_per_step)), bucket_steps)
    steps_per_core = pl.cdiv(steps_total, num_cores)
    steps_total = steps_per_core * num_cores
    n_pad = steps_total * pts_per_step
    num_sub = n_pad // P_SUB

    num_seg_b = max(64, _next_pow2(max(num_seg, 1)))       # bucketed voxel count
    u_pad = num_seg_b + WIN
    pad_id = u_pad + P_SUB                                  # never lands in any window

    feat_p = jnp.pad(feat_sorted.astype(jnp.bfloat16), ((0, n_pad - n), (0, 0)))
    inv_p = jnp.pad(inv, (0, n_pad - n), constant_values=pad_id)

    pos = jnp.arange(n_pad, dtype=jnp.int32)
    pos_in_sub = pos % P_SUB
    neq = inv_p[1:] != inv_p[:-1]
    first_of_run = jnp.concatenate([jnp.ones((1,), jnp.bool_), neq])
    last_of_run = jnp.concatenate([neq, jnp.ones((1,), jnp.bool_)])

    if _roll_pulls_from_earlier():
        # Prefix scan: reach = distance to the sub-tile-local run start;
        # representative = last row of the tile-local run.
        run_start = lax.cummax(jnp.where(first_of_run, pos, 0), axis=0)
        dist = jnp.minimum(pos - run_start, pos_in_sub)
        rep = last_of_run | (pos_in_sub == P_SUB - 1)
    else:
        # Suffix scan for the opposite hardware rotate direction.
        run_end = lax.cummin(jnp.where(last_of_run, pos, n_pad), axis=0, reverse=True)
        dist = jnp.minimum(run_end - pos, (P_SUB - 1) - pos_in_sub)
        rep = first_of_run | (pos_in_sub == 0)

    inv_2d = inv_p.reshape(num_sub, P_SUB)
    # 8-aligned per-sub-tile base, clamped so [base, base+WIN) is always inside
    # the (u_pad, C) accumulator (also covers fully-padded sub-tiles).
    bases = jnp.clip((inv_2d[:, 0] // 8) * 8, 0, u_pad - WIN).astype(jnp.int32)
    base_per_pt = jnp.repeat(bases, P_SUB)
    sidx = jnp.where(rep & (inv_p < num_seg), inv_p - base_per_pt, -1).astype(jnp.int32)

    sidx_arr = sidx.reshape(num_sub, 1, P_SUB)
    dist_arr = dist.astype(jnp.int32).reshape(n_pad, 1)

    spc = steps_per_core
    kernel = functools.partial(_scatter_max_kernel, k_sub)
    out = pl.pallas_call(
        kernel,
        out_shape=jax.ShapeDtypeStruct((num_cores, u_pad, cdim), jnp.float32),
        grid_spec=pltpu.PrefetchScalarGridSpec(
            num_scalar_prefetch=1,
            grid=(num_cores, steps_per_core),
            in_specs=[
                pl.BlockSpec((k_sub, 1, P_SUB), lambda c, s, b: (c * spc + s, 0, 0)),
                pl.BlockSpec((k_sub * P_SUB, 1), lambda c, s, b: (c * spc + s, 0)),
                pl.BlockSpec((k_sub * P_SUB, cdim), lambda c, s, b: (c * spc + s, 0)),
            ],
            out_specs=pl.BlockSpec((None, u_pad, cdim), lambda c, s, b: (c, 0, 0)),
        ),
        compiler_params=pltpu.CompilerParams(
            dimension_semantics=("parallel", "arbitrary"),
            vmem_limit_bytes=48 * 1024 * 1024),
    )(bases, sidx_arr, dist_arr, feat_p)
    # TODO(synk): for scenes where the (u_pad, 64) f32 accumulator outgrows VMEM
    # (v7x: 64 MiB/TC), tile the segment axis via scalar-prefetched per-segment
    # point ranges (exploiting the sort) and/or switch the accumulator to bf16.
    return jnp.max(out, axis=0)[:num_seg]


# ----------------------------------------------------------------------------
# Parameter init (PyTorch-layout: BN eval-mode stats + Linear W[in,out], b) and
# BN/bias folding into MXU-ready bf16 weights / f32 biases.
# ----------------------------------------------------------------------------
def init_params(key, fea_dim=6, out_pt_fea_dim=64):
    dims = [fea_dim, 64, 128, 256, out_pt_fea_dim]
    keys = iter(jax.random.split(key, 32))

    def bn(c):
        g = 1.0 + 0.1 * jax.random.normal(next(keys), (c,), jnp.float32)
        b = 0.05 * jax.random.normal(next(keys), (c,), jnp.float32)
        rm = 0.1 * jax.random.normal(next(keys), (c,), jnp.float32)
        rv = 1.0 + 0.1 * jax.random.uniform(next(keys), (c,), jnp.float32)
        scale = g / jnp.sqrt(rv + 1e-5)
        shift = b - rm * scale
        return scale.reshape(1, c), shift.reshape(1, c)

    def lin(cin, cout):
        w = jax.random.normal(next(keys), (cin, cout), jnp.float32) * (2.0 / cin) ** 0.5
        b = 0.01 * jax.random.normal(next(keys), (1, cout), jnp.float32)
        return w, b

    s0, t0 = bn(dims[0])
    w1, b1 = lin(dims[0], dims[1]); s1, t1 = bn(dims[1])
    w2, b2 = lin(dims[1], dims[2]); s2, t2 = bn(dims[2])
    w3, b3 = lin(dims[2], dims[3]); s3, t3 = bn(dims[3])
    w4, b4 = lin(dims[3], dims[4])
    return [s0, t0, w1, b1, s1, t1, w2, b2, s2, t2, w3, b3, s3, t3, w4, b4]


def fold_params(params, fin_pad=8):
    """Fold eval-mode BN + biases: y = relu((x*s+t)@W + b) -> relu(x@W' + b').
    No output-channel padding (real 64 channels end-to-end)."""
    (s0, t0, w1, b1, s1, t1, w2, b2, s2, t2, w3, b3, s3, t3, w4, b4) = params
    w1f = (s0.reshape(-1, 1) * w1) * s1
    b1f = (t0 @ w1 + b1) * s1 + t1
    w2f = w2 * s2
    b2f = b2 * s2 + t2
    w3f = w3 * s3
    b3f = b3 * s3 + t3
    w4f, b4f = w4, b4

    fin = w1f.shape[0]
    w1f = jnp.pad(w1f, ((0, fin_pad - fin), (0, 0)))           # 6 -> 8 input channels

    bf = lambda a: a.astype(jnp.bfloat16)
    f32 = lambda a: a.astype(jnp.float32)
    return [bf(w1f), f32(b1f), bf(w2f), f32(b2f), bf(w3f), f32(b3f), bf(w4f), f32(b4f)]


def _ppmodel_ref(x, folded):
    """Plain-JAX reference of the folded bf16 MLP (for correctness checks)."""
    w1, b1, w2, b2, w3, b3, w4, b4 = folded
    xp = jnp.pad(x, ((0, 0), (0, w1.shape[0] - x.shape[1]))).astype(jnp.bfloat16)
    h = jnp.maximum(jnp.dot(xp, w1, preferred_element_type=jnp.float32) + b1, 0.0).astype(jnp.bfloat16)
    h = jnp.maximum(jnp.dot(h, w2, preferred_element_type=jnp.float32) + b2, 0.0).astype(jnp.bfloat16)
    h = jnp.maximum(jnp.dot(h, w3, preferred_element_type=jnp.float32) + b3, 0.0).astype(jnp.bfloat16)
    h = jnp.dot(h, w4, preferred_element_type=jnp.float32) + b4
    return h.astype(jnp.bfloat16)


# ----------------------------------------------------------------------------
# Full forward pass (plain-JAX glue around the two Pallas kernels).
# ----------------------------------------------------------------------------
def cylinder_fea_forward(pt_fea, pt_lab, xyz, batch_size, configs, params, shuffle_key,
                         num_cores=1):
    cat_xyz = jnp.concatenate(
        [jnp.pad(xyz[i], ((0, 0), (1, 0)), constant_values=float(i))
         for i in range(len(xyz))], axis=0)                              # [N, 4]
    cat_pt_fea = jnp.concatenate(pt_fea, axis=0)                         # [N, raw_fea]
    cat_pt_lab = jnp.concatenate(pt_lab, axis=0)                         # [N]
    pt_num = cat_xyz.shape[0]

    max_bound = jnp.asarray(configs['dataset_params']['max_volume_space'], jnp.float32)
    min_bound = jnp.asarray(configs['dataset_params']['min_volume_space'], jnp.float32)
    crop_range = max_bound - min_bound
    grid_size_f = jnp.asarray(configs['model_params']['output_shape'], jnp.float32)
    intervals = crop_range / (grid_size_f - 1.0)

    # gen_pt_ind_cuda equivalent: voxel index of the clamped xyz.
    xyz_clamped = jnp.clip(cat_xyz[:, 1:], min_bound, max_bound)
    ind_f = (xyz_clamped - min_bound) / intervals
    cat_pt_ind = jnp.concatenate(
        [cat_xyz[:, :1].astype(jnp.int32), jnp.floor(ind_f).astype(jnp.int32)], axis=1)

    voxel_centers = (cat_pt_ind[:, 1:].astype(jnp.float32) + 0.5) * intervals + min_bound
    rel_xyz = cat_xyz[:, 1:] - voxel_centers
    cat_pt_fea = jnp.concatenate([rel_xyz, cat_pt_fea], axis=1)          # [N, fea_dim]

    gs = configs['model_params']['output_shape']
    num_class = configs['model_params']['num_class']
    ignore_label = configs['dataset_params']['ignore_label']
    # TODO(synk): gen_voxel_label_cuda is a custom CUDA op; approximated as a
    # per-voxel per-class point count on top of the ignore_label init, then argmax
    # (empty voxels resolve to class 0 via the argmax tie; exact CUDA semantics unknown).
    voxel_labels = jnp.full((batch_size, gs[0], gs[1], gs[2], num_class), ignore_label, jnp.int32)
    voxel_labels = voxel_labels.at[cat_pt_ind[:, 0], cat_pt_ind[:, 1],
                                   cat_pt_ind[:, 2], cat_pt_ind[:, 3],
                                   cat_pt_lab].add(1)
    voxel_labels = jnp.argmax(voxel_labels, axis=-1).astype(jnp.int32)

    # Faithful to the reference: only cat_pt_fea is shuffled (cat_pt_ind is not).
    shuffled_ind = jax.random.permutation(shuffle_key, pt_num)

    # NOTE: jnp.unique without size= has data-dependent shapes (host sync, not
    # jittable); fine here since the wrapper runs eagerly.
    unq, unq_inv = jnp.unique(cat_pt_ind, axis=0, return_inverse=True)
    unq_inv = unq_inv.reshape(-1).astype(jnp.int32)
    num_unq = int(unq.shape[0])

    # Sort points by voxel id and fold that permutation with the shuffle, so the
    # only gather is on the cheap 6-channel input and the MLP output already
    # arrives voxel-sorted (no post-MLP [N, 64] gather).
    order = jnp.argsort(unq_inv)
    inv_sorted = unq_inv[order]
    fea_sorted = cat_pt_fea[shuffled_ind[order], :]

    folded = fold_params(params)
    processed_sorted = ppmodel_forward(fea_sorted.astype(jnp.float32), folded)  # Pallas kernel 1
    pooled = scatter_max_sorted(processed_sorted, inv_sorted, num_unq,
                                num_cores=num_cores)                             # Pallas kernel 2

    # fea_compre is None (module default) -> no fea_compression branch.
    return unq, pooled, voxel_labels, cat_pt_ind


if __name__ == "__main__":
    key = jax.random.PRNGKey(0)
    k_param, k_xyz, k_fea, k_lab, k_shuf, k_chk1, k_chk2 = jax.random.split(key, 7)

    batch_size = 2
    n_per = 128
    raw_fea_dim = 3                 # per-point features supplied in pt_fea
    fea_dim = raw_fea_dim + 3       # PPmodel input = rel_xyz (3) + raw features
    out_pt_fea_dim = 64

    configs = {
        'dataset_params': {'max_volume_space': [10.0, 10.0, 4.0],
                           'min_volume_space': [-10.0, -10.0, -4.0],
                           'ignore_label': 255},
        'model_params': {'output_shape': [8, 8, 4], 'num_class': 5},
    }

    params = init_params(k_param, fea_dim=fea_dim, out_pt_fea_dim=out_pt_fea_dim)
    folded = fold_params(params)

    # --- standalone correctness checks of both Pallas kernels ----------------
    xt = jax.random.normal(k_chk1, (200, fea_dim), jnp.float32)
    y_pal = ppmodel_forward(xt, folded, tile_n=128)
    y_ref = _ppmodel_ref(xt, folded)
    np.testing.assert_allclose(np.asarray(y_pal, dtype=np.float32),
                               np.asarray(y_ref, dtype=np.float32),
                               rtol=2e-2, atol=2e-2)

    raw_ids = jax.random.randint(k_chk2, (200,), 0, 37, jnp.int32)
    uniq_ids, seg = jnp.unique(raw_ids, return_inverse=True)
    seg = seg.reshape(-1)
    nseg = int(uniq_ids.shape[0])
    sord = jnp.argsort(seg)
    # Exercise the multi-core (v7x) path with num_cores=2 and small sub-tiling.
    pooled_pal = scatter_max_sorted(y_pal[sord], seg[sord], nseg, k_sub=2, num_cores=2)
    pooled_ref = jax.ops.segment_max(y_pal.astype(jnp.float32), seg, num_segments=nseg)
    np.testing.assert_allclose(np.asarray(pooled_pal), np.asarray(pooled_ref),
                               rtol=1e-5, atol=1e-5)

    # --- full forward pass ----------------------------------------------------
    xyz_keys = jax.random.split(k_xyz, batch_size)
    fea_keys = jax.random.split(k_fea, batch_size)
    lab_keys = jax.random.split(k_lab, batch_size)
    lo = jnp.asarray([-11.0, -11.0, -4.5], jnp.float32)
    hi = jnp.asarray([11.0, 11.0, 4.5], jnp.float32)
    xyz = [jax.random.uniform(xyz_keys[i], (n_per, 3), jnp.float32, minval=lo, maxval=hi)
           for i in range(batch_size)]
    pt_fea = [jax.random.normal(fea_keys[i], (n_per, raw_fea_dim), jnp.float32)
              for i in range(batch_size)]
    pt_lab = [jax.random.randint(lab_keys[i], (n_per,), 0,
                                 configs['model_params']['num_class'], jnp.int32)
              for i in range(batch_size)]

    unq, pooled, voxel_labels, cat_pt_ind = cylinder_fea_forward(
        pt_fea, pt_lab, xyz, batch_size, configs, params, k_shuf)
    jax.block_until_ready((unq, pooled, voxel_labels, cat_pt_ind))

    assert pooled.shape == (unq.shape[0], out_pt_fea_dim)
    assert voxel_labels.shape == (batch_size, 8, 8, 4)
    assert cat_pt_ind.shape == (batch_size * n_per, 4)
    print("KERNEL_OK")
</pallas_src>

<mosaic_0001>
module attributes {stable_mosaic.version = 11 : i64} {
  func.func @_ppmodel_kernel(%arg0: i32, %arg1: memref<128x8xbf16, #tpu.memory_space<vmem>>, %arg2: memref<8x64xbf16, #tpu.memory_space<vmem>>, %arg3: memref<1x64xf32, #tpu.memory_space<vmem>>, %arg4: memref<64x128xbf16, #tpu.memory_space<vmem>>, %arg5: memref<1x128xf32, #tpu.memory_space<vmem>>, %arg6: memref<128x256xbf16, #tpu.memory_space<vmem>>, %arg7: memref<1x256xf32, #tpu.memory_space<vmem>>, %arg8: memref<256x64xbf16, #tpu.memory_space<vmem>>, %arg9: memref<1x64xf32, #tpu.memory_space<vmem>>, %arg10: memref<128x64xbf16, #tpu.memory_space<vmem>>) attributes {dimension_semantics = [#tpu.dimension_semantics<parallel>], iteration_bounds = array<i64: 4>, scalar_prefetch = 0 : i64, scratch_operands = 0 : i64, tpu.core_type = #tpu.core_type<tc>, window_params = [{transform_indices = @transform_0, window_bounds = array<i64: 128, 8>}, {pipeline_mode = #tpu.pipeline_mode<synchronous>, transform_indices = @transform_1, window_bounds = array<i64: 8, 64>}, {pipeline_mode = #tpu.pipeline_mode<synchronous>, transform_indices = @transform_2, window_bounds = array<i64: 1, 64>}, {pipeline_mode = #tpu.pipeline_mode<synchronous>, transform_indices = @transform_3, window_bounds = array<i64: 64, 128>}, {pipeline_mode = #tpu.pipeline_mode<synchronous>, transform_indices = @transform_4, window_bounds = array<i64: 1, 128>}, {pipeline_mode = #tpu.pipeline_mode<synchronous>, transform_indices = @transform_5, window_bounds = array<i64: 128, 256>}, {pipeline_mode = #tpu.pipeline_mode<synchronous>, transform_indices = @transform_6, window_bounds = array<i64: 1, 256>}, {pipeline_mode = #tpu.pipeline_mode<synchronous>, transform_indices = @transform_7, window_bounds = array<i64: 256, 64>}, {pipeline_mode = #tpu.pipeline_mode<synchronous>, transform_indices = @transform_8, window_bounds = array<i64: 1, 64>}, {transform_indices = @transform_9, window_bounds = array<i64: 128, 64>}]} {
    %c0 = arith.constant 0 : index
    %c0_0 = arith.constant 0 : index
    %0 = vector.load %arg1[%c0, %c0_0] : memref<128x8xbf16, #tpu.memory_space<vmem>>, vector<128x8xbf16>
    %c0_1 = arith.constant 0 : index
    %c0_2 = arith.constant 0 : index
    %1 = vector.load %arg2[%c0_1, %c0_2] : memref<8x64xbf16, #tpu.memory_space<vmem>>, vector<8x64xbf16>
    %cst = arith.constant dense<0.000000e+00> : vector<128x64xf32>
    %2 = tpu.matmul %0, %1, %cst {dimension_numbers = #tpu.dot_dimension_numbers<[1], [0], [0], [1], [0, 0, 1, 1], [], []>} : vector<128x8xbf16>, vector<8x64xbf16>, vector<128x64xf32> -> vector<128x64xf32>
    %c0_3 = arith.constant 0 : index
    %c0_4 = arith.constant 0 : index
    %3 = vector.load %arg3[%c0_3, %c0_4] : memref<1x64xf32, #tpu.memory_space<vmem>>, vector<1x64xf32>
    %4 = vector.broadcast %3 : vector<1x64xf32> to vector<128x64xf32>
    %5 = arith.addf %2, %4 : vector<128x64xf32>
    %cst_5 = arith.constant 0.000000e+00 : f32
    %6 = vector.broadcast %cst_5 : f32 to vector<128x64xf32>
    %7 = arith.maximumf %5, %6 : vector<128x64xf32>
    %8 = arith.truncf %7 : vector<128x64xf32> to vector<128x64xbf16>
    %c0_6 = arith.constant 0 : index
    %c0_7 = arith.constant 0 : index
    %9 = vector.load %arg4[%c0_6, %c0_7] : memref<64x128xbf16, #tpu.memory_space<vmem>>, vector<64x128xbf16>
    %cst_8 = arith.constant dense<0.000000e+00> : vector<128x128xf32>
    %10 = tpu.matmul %8, %9, %cst_8 {dimension_numbers = #tpu.dot_dimension_numbers<[1], [0], [0], [1], [0, 0, 1, 1], [], []>} : vector<128x64xbf16>, vector<64x128xbf16>, vector<128x128xf32> -> vector<128x128xf32>
    %c0_9 = arith.constant 0 : index
    %c0_10 = arith.constant 0 : index
    %11 = vector.load %arg5[%c0_9, %c0_10] : memref<1x128xf32, #tpu.memory_space<vmem>>, vector<1x128xf32>
    %12 = vector.broadcast %11 : vector<1x128xf32> to vector<128x128xf32>
    %13 = arith.addf %10, %12 : vector<128x128xf32>
    %cst_11 = arith.constant 0.000000e+00 : f32
    %14 = vector.broadcast %cst_11 : f32 to vector<128x128xf32>
    %15 = arith.maximumf %13, %14 : vector<128x128xf32>
    %16 = arith.truncf %15 : vector<128x128xf32> to vector<128x128xbf16>
    %c0_12 = arith.constant 0 : index
    %c0_13 = arith.constant 0 : index
    %17 = vector.load %arg6[%c0_12, %c0_13] : memref<128x256xbf16, #tpu.memory_space<vmem>>, vector<128x256xbf16>
    %cst_14 = arith.constant dense<0.000000e+00> : vector<128x256xf32>
    %18 = tpu.matmul %16, %17, %cst_14 {dimension_numbers = #tpu.dot_dimension_numbers<[1], [0], [0], [1], [0, 0, 1, 1], [], []>} : vector<128x128xbf16>, vector<128x256xbf16>, vector<128x256xf32> -> vector<128x256xf32>
    %c0_15 = arith.constant 0 : index
    %c0_16 = arith.constant 0 : index
    %19 = vector.load %arg7[%c0_15, %c0_16] : memref<1x256xf32, #tpu.memory_space<vmem>>, vector<1x256xf32>
    %20 = vector.broadcast %19 : vector<1x256xf32> to vector<128x256xf32>
    %21 = arith.addf %18, %20 : vector<128x256xf32>
    %cst_17 = arith.constant 0.000000e+00 : f32
    %22 = vector.broadcast %cst_17 : f32 to vector<128x256xf32>
    %23 = arith.maximumf %21, %22 : vector<128x256xf32>
    %24 = arith.truncf %23 : vector<128x256xf32> to vector<128x256xbf16>
    %c0_18 = arith.constant 0 : index
    %c0_19 = arith.constant 0 : index
    %25 = vector.load %arg8[%c0_18, %c0_19] : memref<256x64xbf16, #tpu.memory_space<vmem>>, vector<256x64xbf16>
    %cst_20 = arith.constant dense<0.000000e+00> : vector<128x64xf32>
    %26 = tpu.matmul %24, %25, %cst_20 {dimension_numbers = #tpu.dot_dimension_numbers<[1], [0], [0], [1], [0, 0, 1, 1], [], []>} : vector<128x256xbf16>, vector<256x64xbf16>, vector<128x64xf32> -> vector<128x64xf32>
    %c0_21 = arith.constant 0 : index
    %c0_22 = arith.constant 0 : index
    %27 = vector.load %arg9[%c0_21, %c0_22] : memref<1x64xf32, #tpu.memory_space<vmem>>, vector<1x64xf32>
    %28 = vector.broadcast %27 : vector<1x64xf32> to vector<128x64xf32>
    %29 = arith.addf %26, %28 : vector<128x64xf32>
    %30 = arith.truncf %29 : vector<128x64xf32> to vector<128x64xbf16>
    %c0_23 = arith.constant 0 : index
    %c0_24 = arith.constant 0 : index
    %31 = vector.load %arg10[%c0_23, %c0_24] : memref<128x64xbf16, #tpu.memory_space<vmem>>, vector<128x64xbf16>
    tpu.vector_store %arg10[%c0_23, %c0_24], %30 {strides = array<i32>} : memref<128x64xbf16, #tpu.memory_space<vmem>>, vector<128x64xbf16>,
    return
  }
  func.func @transform_0(%arg0: i32) -> (i32, i32) {
    %c0_i32 = arith.constant 0 : i32
    %c0_i32_0 = arith.constant 0 : i32
    return %arg0, %c0_i32 : i32, i32
  }
  func.func @transform_1(%arg0: i32) -> (i32, i32) {
    %c0_i32 = arith.constant 0 : i32
    %c0_i32_0 = arith.constant 0 : i32
    %c0_i32_1 = arith.constant 0 : i32
    return %c0_i32, %c0_i32_0 : i32, i32
  }
  func.func @transform_2(%arg0: i32) -> (i32, i32) {
    %c0_i32 = arith.constant 0 : i32
    %c0_i32_0 = arith.constant 0 : i32
    %c0_i32_1 = arith.constant 0 : i32
    return %c0_i32, %c0_i32_0 : i32, i32
  }
  func.func @transform_3(%arg0: i32) -> (i32, i32) {
    %c0_i32 = arith.constant 0 : i32
    %c0_i32_0 = arith.constant 0 : i32
    %c0_i32_1 = arith.constant 0 : i32
    return %c0_i32, %c0_i32_0 : i32, i32
  }
  func.func @transform_4(%arg0: i32) -> (i32, i32) {
    %c0_i32 = arith.constant 0 : i32
    %c0_i32_0 = arith.constant 0 : i32
    %c0_i32_1 = arith.constant 0 : i32
    return %c0_i32, %c0_i32_0 : i32, i32
  }
  func.func @transform_5(%arg0: i32) -> (i32, i32) {
    %c0_i32 = arith.constant 0 : i32
    %c0_i32_0 = arith.constant 0 : i32
    %c0_i32_1 = arith.constant 0 : i32
    return %c0_i32, %c0_i32_0 : i32, i32
  }
  func.func @transform_6(%arg0: i32) -> (i32, i32) {
    %c0_i32 = arith.constant 0 : i32
    %c0_i32_0 = arith.constant 0 : i32
    %c0_i32_1 = arith.constant 0 : i32
    return %c0_i32, %c0_i32_0 : i32, i32
  }
  func.func @transform_7(%arg0: i32) -> (i32, i32) {
    %c0_i32 = arith.constant 0 : i32
    %c0_i32_0 = arith.constant 0 : i32
    %c0_i32_1 = arith.constant 0 : i32
    return %c0_i32, %c0_i32_0 : i32, i32
  }
  func.func @transform_8(%arg0: i32) -> (i32, i32) {
    %c0_i32 = arith.constant 0 : i32
    %c0_i32_0 = arith.constant 0 : i32
    %c0_i32_1 = arith.constant 0 : i32
    return %c0_i32, %c0_i32_0 : i32, i32
  }
  func.func @transform_9(%arg0: i32) -> (i32, i32) {
    %c0_i32 = arith.constant 0 : i32
    %c0_i32_0 = arith.constant 0 : i32
    return %arg0, %c0_i32 : i32, i32
  }
}

</mosaic_0001>

<llo_original>
// kernel: tpu_custom_call.1
$region0: #{tpu_custom_call.1}
  #allocation0 [shape = 'u32[]', space=smem, size = 0x4, offset = 0x4, fixed_abs, tag = 'smem constant byte address 0x4 - core index']
  #allocation1 [shape = 'u32[72,128]{1,0:T(1,128)}', space=vmem, size = 0x9000, scoped, tag = 'internal scratch']
  %s0 = inlined_call_operand.vmem [shape: bf16[512,8], index: 0, kind: input, shape index: {}]
  %s1 = inlined_call_operand.vmem [shape: bf16[8,64], index: 1, kind: input, shape index: {}]
  %s2 = inlined_call_operand.vmem [shape: f32[1,64], index: 2, kind: input, shape index: {}]
  %s3 = inlined_call_operand.vmem [shape: bf16[64,128], index: 3, kind: input, shape index: {}]
  %s4 = inlined_call_operand.vmem [shape: f32[1,128], index: 4, kind: input, shape index: {}]
  %s5 = inlined_call_operand.vmem [shape: bf16[128,256], index: 5, kind: input, shape index: {}]
  %s6 = inlined_call_operand.vmem [shape: f32[1,256], index: 6, kind: input, shape index: {}]
  %s7 = inlined_call_operand.vmem [shape: bf16[256,64], index: 7, kind: input, shape index: {}]
  %s8 = inlined_call_operand.vmem [shape: f32[1,64], index: 8, kind: input, shape index: {}]
  %s9 = inlined_call_operand.vmem [shape: bf16[512,64], index: 9, kind: output, shape index: {}]
  %s10 = sld [smem:[#allocation0]]
  $region69: #{tpu_custom_call.1} parent=0
    _
  %s12 = ssub.s32 1, %s10
  %s13 = scalar_select 0, %s12, %s10
  loop: start=0, step=1, limit=6
  $region2: #{tpu_custom_call.1} parent=0 // loop_pre_header
    _
  $region3: #{tpu_custom_call.1} parent=0 // loop_header
    %s15 = sphi 0, %s19
    %p16 = scmp.ge.s32.totalorder %s15, 6
    %s25 = sphi 0, %s27
    %s28 = sphi 0, %s25
    %s29 = sphi 0, %s28
    %s45 = sphi 0, %s29
    %s49 = sphi 0, %s49
    %s51 = sphi 0, %s49
    %s52 = sphi 0, %s51
    %s66 = sphi 0, %s52
    %s70 = sphi 0, %s70
    %s72 = sphi 0, %s70
    %s73 = sphi 0, %s72
    %s87 = sphi 0, %s73
    %s91 = sphi 0, %s91
    %s93 = sphi 0, %s91
    %s94 = sphi 0, %s93
    %s108 = sphi 0, %s94
    %s112 = sphi 0, %s112
    %s114 = sphi 0, %s112
    %s115 = sphi 0, %s114
    %s129 = sphi 0, %s115
    %s133 = sphi 0, %s133
    %s135 = sphi 0, %s133
    %s136 = sphi 0, %s135
    %s150 = sphi 0, %s136
    %s154 = sphi 0, %s154
    %s156 = sphi 0, %s154
    %s157 = sphi 0, %s156
    %s171 = sphi 0, %s157
    %s175 = sphi 0, %s175
    %s177 = sphi 0, %s175
    %s178 = sphi 0, %s177
    %s192 = sphi 0, %s178
    %s196 = sphi 0, %s196
    %s198 = sphi 0, %s196
    %s199 = sphi 0, %s198
    %s213 = sphi 0, %s199
    %s219 = sphi 0, %s221
    %s222 = sphi 0, %s219
    %s223 = sphi 0, %s222
    %s239 = sphi 0, %s223
  $region4: #{tpu_custom_call.1} parent=0 // loop_header_branch
    %18 = sbr.rel (%p16) target = $region8
  $region5: #{tpu_custom_call.1} parent=0 // loop_body
    %s20 = ssub.s32 %s15, 1
    %s21 = ssub.s32 %s15, 2
    %s22 = sadd.s32 %s15, 1
    %s23 = ssub.s32 %s15, %s22
    %p24 = scmp.eq.s32.totalorder %s23, 0
    %s26 = sadd.s32 %s25, 1
    %s27 = scalar_select %p24, %s25, %s26
    %p30 = pneg %p24
    %p31 = scmp.eq.s32.totalorder %s15, 3
    %p32 = por %p30, %p31
    %p33 = scmp.ne.s32.totalorder %s25, %s28
    %p34 = scmp.eq.s32.totalorder %s15, 0
    %p35 = por %p33, %p34
    %p36 = scmp.ne.s32.totalorder %s25, %s28
    %p37 = scmp.eq.s32.totalorder %s20, 3
    %p38 = por %p36, %p37
    %p39 = scmp.ne.s32.totalorder %s28, %s29
    %p40 = scmp.eq.s32.totalorder %s20, 0
    %p41 = por %p39, %p40
    %p42 = scmp.ne.s32.totalorder %s28, %s29
    %p43 = scmp.eq.s32.totalorder %s21, 3
    %p44 = por %p42, %p43
    %p46 = scmp.ne.s32.totalorder %s29, %s45
    %p47 = scmp.eq.s32.totalorder %s21, 0
    %p48 = por %p46, %p47
    %s50 = sadd.s32 %s49, 1
    %p53 = scmp.eq.s32.totalorder %s15, 3
    %p54 = scmp.ne.s32.totalorder %s49, %s51
    %p55 = scmp.eq.s32.totalorder %s15, 0
    %p56 = por %p54, %p55
    %p57 = scmp.ne.s32.totalorder %s49, %s51
    %p58 = scmp.eq.s32.totalorder %s20, 3
    %p59 = por %p57, %p58
    %p60 = scmp.ne.s32.totalorder %s51, %s52
    %p61 = scmp.eq.s32.totalorder %s20, 0
    %p62 = por %p60, %p61
    %p63 = scmp.ne.s32.totalorder %s51, %s52
    %p64 = scmp.eq.s32.totalorder %s21, 3
    %p65 = por %p63, %p64
    %p67 = scmp.ne.s32.totalorder %s52, %s66
    %p68 = scmp.eq.s32.totalorder %s21, 0
    %p69 = por %p67, %p68
    %s71 = sadd.s32 %s70, 1
    %p74 = scmp.eq.s32.totalorder %s15, 3
    %p75 = scmp.ne.s32.totalorder %s70, %s72
    %p76 = scmp.eq.s32.totalorder %s15, 0
    %p77 = por %p75, %p76
    %p78 = scmp.ne.s32.totalorder %s70, %s72
    %p79 = scmp.eq.s32.totalorder %s20, 3
    %p80 = por %p78, %p79
    %p81 = scmp.ne.s32.totalorder %s72, %s73
    %p82 = scmp.eq.s32.totalorder %s20, 0
    %p83 = por %p81, %p82
    %p84 = scmp.ne.s32.totalorder %s72, %s73
    %p85 = scmp.eq.s32.totalorder %s21, 3
    %p86 = por %p84, %p85
    %p88 = scmp.ne.s32.totalorder %s73, %s87
    %p89 = scmp.eq.s32.totalorder %s21, 0
    %p90 = por %p88, %p89
    %s92 = sadd.s32 %s91, 1
    %p95 = scmp.eq.s32.totalorder %s15, 3
    %p96 = scmp.ne.s32.totalorder %s91, %s93
    %p97 = scmp.eq.s32.totalorder %s15, 0
    %p98 = por %p96, %p97
    %p99 = scmp.ne.s32.totalorder %s91, %s93
    %p100 = scmp.eq.s32.totalorder %s20, 3
    %p101 = por %p99, %p100
    %p102 = scmp.ne.s32.totalorder %s93, %s94
    %p103 = scmp.eq.s32.totalorder %s20, 0
    %p104 = por %p102, %p103
    %p105 = scmp.ne.s32.totalorder %s93, %s94
    %p106 = scmp.eq.s32.totalorder %s21, 3
    %p107 = por %p105, %p106
    %p109 = scmp.ne.s32.totalorder %s94, %s108
    %p110 = scmp.eq.s32.totalorder %s21, 0
    %p111 = por %p109, %p110
    %s113 = sadd.s32 %s112, 1
    %p116 = scmp.eq.s32.totalorder %s15, 3
    %p117 = scmp.ne.s32.totalorder %s112, %s114
    %p118 = scmp.eq.s32.totalorder %s15, 0
    %p119 = por %p117, %p118
    %p120 = scmp.ne.s32.totalorder %s112, %s114
    %p121 = scmp.eq.s32.totalorder %s20, 3
    %p122 = por %p120, %p121
    %p123 = scmp.ne.s32.totalorder %s114, %s115
    %p124 = scmp.eq.s32.totalorder %s20, 0
    %p125 = por %p123, %p124
    %p126 = scmp.ne.s32.totalorder %s114, %s115
    %p127 = scmp.eq.s32.totalorder %s21, 3
    %p128 = por %p126, %p127
    %p130 = scmp.ne.s32.totalorder %s115, %s129
    %p131 = scmp.eq.s32.totalorder %s21, 0
    %p132 = por %p130, %p131
    %s134 = sadd.s32 %s133, 1
    %p137 = scmp.eq.s32.totalorder %s15, 3
    %p138 = scmp.ne.s32.totalorder %s133, %s135
    %p139 = scmp.eq.s32.totalorder %s15, 0
    %p140 = por %p138, %p139
    %p141 = scmp.ne.s32.totalorder %s133, %s135
    %p142 = scmp.eq.s32.totalorder %s20, 3
    %p143 = por %p141, %p142
    %p144 = scmp.ne.s32.totalorder %s135, %s136
    %p145 = scmp.eq.s32.totalorder %s20, 0
    %p146 = por %p144, %p145
    %p147 = scmp.ne.s32.totalorder %s135, %s136
    %p148 = scmp.eq.s32.totalorder %s21, 3
    %p149 = por %p147, %p148
    %p151 = scmp.ne.s32.totalorder %s136, %s150
    %p152 = scmp.eq.s32.totalorder %s21, 0
    %p153 = por %p151, %p152
    %s155 = sadd.s32 %s154, 1
    %p158 = scmp.eq.s32.totalorder %s15, 3
    %p159 = scmp.ne.s32.totalorder %s154, %s156
    %p160 = scmp.eq.s32.totalorder %s15, 0
    %p161 = por %p159, %p160
    %p162 = scmp.ne.s32.totalorder %s154, %s156
    %p163 = scmp.eq.s32.totalorder %s20, 3
    %p164 = por %p162, %p163
    %p165 = scmp.ne.s32.totalorder %s156, %s157
    %p166 = scmp.eq.s32.totalorder %s20, 0
    %p167 = por %p165, %p166
    %p168 = scmp.ne.s32.totalorder %s156, %s157
    %p169 = scmp.eq.s32.totalorder %s21, 3
    %p170 = por %p168, %p169
    %p172 = scmp.ne.s32.totalorder %s157, %s171
    %p173 = scmp.eq.s32.totalorder %s21, 0
    %p174 = por %p172, %p173
    %s176 = sadd.s32 %s175, 1
    %p179 = scmp.eq.s32.totalorder %s15, 3
    %p180 = scmp.ne.s32.totalorder %s175, %s177
    %p181 = scmp.eq.s32.totalorder %s15, 0
    %p182 = por %p180, %p181
    %p183 = scmp.ne.s32.totalorder %s175, %s177
    %p184 = scmp.eq.s32.totalorder %s20, 3
    %p185 = por %p183, %p184
    %p186 = scmp.ne.s32.totalorder %s177, %s178
    %p187 = scmp.eq.s32.totalorder %s20, 0
    %p188 = por %p186, %p187
    %p189 = scmp.ne.s32.totalorder %s177, %s178
    %p190 = scmp.eq.s32.totalorder %s21, 3
    %p191 = por %p189, %p190
    %p193 = scmp.ne.s32.totalorder %s178, %s192
    %p194 = scmp.eq.s32.totalorder %s21, 0
    %p195 = por %p193, %p194
    %s197 = sadd.s32 %s196, 1
    %p200 = scmp.eq.s32.totalorder %s15, 3
    %p201 = scmp.ne.s32.totalorder %s196, %s198
    %p202 = scmp.eq.s32.totalorder %s15, 0
    %p203 = por %p201, %p202
    %p204 = scmp.ne.s32.totalorder %s196, %s198
    %p205 = scmp.eq.s32.totalorder %s20, 3
    %p206 = por %p204, %p205
    %p207 = scmp.ne.s32.totalorder %s198, %s199
    %p208 = scmp.eq.s32.totalorder %s20, 0
    %p209 = por %p207, %p208
    %p210 = scmp.ne.s32.totalorder %s198, %s199
    %p211 = scmp.eq.s32.totalorder %s21, 3
    %p212 = por %p210, %p211
    %p214 = scmp.ne.s32.totalorder %s199, %s213
    %p215 = scmp.eq.s32.totalorder %s21, 0
    %p216 = por %p214, %p215
    %s217 = ssub.s32 %s15, %s22
    %p218 = scmp.eq.s32.totalorder %s217, 0
    %s220 = sadd.s32 %s219, 1
    %s221 = scalar_select %p218, %s219, %s220
    %p224 = pneg %p218
    %p225 = scmp.eq.s32.totalorder %s15, 3
    %p226 = por %p224, %p225
    %p227 = scmp.ne.s32.totalorder %s219, %s222
    %p228 = scmp.eq.s32.totalorder %s15, 0
    %p229 = por %p227, %p228
    %p230 = scmp.ne.s32.totalorder %s219, %s222
    %p231 = scmp.eq.s32.totalorder %s20, 3
    %p232 = por %p230, %p231
    %p233 = scmp.ne.s32.totalorder %s222, %s223
    %p234 = scmp.eq.s32.totalorder %s20, 0
    %p235 = por %p233, %p234
    %p236 = scmp.ne.s32.totalorder %s222, %s223
    %p237 = scmp.eq.s32.totalorder %s21, 3
    %p238 = por %p236, %p237
    %p240 = scmp.ne.s32.totalorder %s223, %s239
    %p241 = scmp.eq.s32.totalorder %s21, 0
    %p242 = por %p240, %p241
    %p243 = scmp.le.s32.totalorder 1, %s15
    %p244 = scmp.lt.s32.totalorder %s15, 5
    %p245 = pnand %p243, %p244
    %p246 = pneg %p245
    // Predicated region
    $region9: #{tpu_custom_call.1} parent=5 // pred_check
      _
    $region10: #{tpu_custom_call.1} parent=5 // pred_check_branch
      %248 = sbr.rel (%p245) target = $region12
    $region11: #{tpu_custom_call.1} parent=5 // pred_region
      %s249 = ssub.s32 %s15, 1
      // Predicated region
      $region13: #{tpu_custom_call.1} parent=11 // pred_check
        %p250 = pneg %p62
      $region14: #{tpu_custom_call.1} parent=11 // pred_check_branch
        %252 = sbr.rel (%p250) target = $region16
      $region15: #{tpu_custom_call.1} parent=11 // pred_region
        _
      $region16: #{tpu_custom_call.1} parent=11 // pred_fallthru
        _
      // Predicated region
      $region17: #{tpu_custom_call.1} parent=11 // pred_check
        %p253 = pneg %p83
      $region18: #{tpu_custom_call.1} parent=11 // pred_check_branch
        %255 = sbr.rel (%p253) target = $region20
      $region19: #{tpu_custom_call.1} parent=11 // pred_region
        _
      $region20: #{tpu_custom_call.1} parent=11 // pred_fallthru
        _
      // Predicated region
      $region21: #{tpu_custom_call.1} parent=11 // pred_check
        %p256 = pneg %p104
      $region22: #{tpu_custom_call.1} parent=11 // pred_check_branch
        %258 = sbr.rel (%p256) target = $region24
      $region23: #{tpu_custom_call.1} parent=11 // pred_region
        _
      $region24: #{tpu_custom_call.1} parent=11 // pred_fallthru
        _
      // Predicated region
      $region25: #{tpu_custom_call.1} parent=11 // pred_check
        %p259 = pneg %p125
      $region26: #{tpu_custom_call.1} parent=11 // pred_check_branch
        %261 = sbr.rel (%p259) target = $region28
      $region27: #{tpu_custom_call.1} parent=11 // pred_region
        _
      $region28: #{tpu_custom_call.1} parent=11 // pred_fallthru
        _
      // Predicated region
      $region29: #{tpu_custom_call.1} parent=11 // pred_check
        %p262 = pneg %p146
      $region30: #{tpu_custom_call.1} parent=11 // pred_check_branch
        %264 = sbr.rel (%p262) target = $region32
      $region31: #{tpu_custom_call.1} parent=11 // pred_region
        _
      $region32: #{tpu_custom_call.1} parent=11 // pred_fallthru
        _
      // Predicated region
      $region33: #{tpu_custom_call.1} parent=11 // pred_check
        %p265 = pneg %p167
      $region34: #{tpu_custom_call.1} parent=11 // pred_check_branch
        %267 = sbr.rel (%p265) target = $region36
      $region35: #{tpu_custom_call.1} parent=11 // pred_region
        _
      $region36: #{tpu_custom_call.1} parent=11 // pred_fallthru
        _
      // Predicated region
      $region37: #{tpu_custom_call.1} parent=11 // pred_check
        %p268 = pneg %p188
      $region38: #{tpu_custom_call.1} parent=11 // pred_check_branch
        %270 = sbr.rel (%p268) target = $region40
      $region39: #{tpu_custom_call.1} parent=11 // pred_region
        _
      $region40: #{tpu_custom_call.1} parent=11 // pred_fallthru
        _
      // Predicated region
      $region41: #{tpu_custom_call.1} parent=11 // pred_check
        %p271 = pneg %p209
      $region42: #{tpu_custom_call.1} parent=11 // pred_check_branch
        %273 = sbr.rel (%p271) target = $region44
      $region43: #{tpu_custom_call.1} parent=11 // pred_region
        _
      $region44: #{tpu_custom_call.1} parent=11 // pred_fallthru
        _
    $region12: #{tpu_custom_call.1} parent=5 // pred_fallthru
      _
    %p274 = scmp.lt.s32.totalorder %s15, 4
    // Predicated region
    $region45: #{tpu_custom_call.1} parent=5 // pred_check
      %p275 = pneg %p274
    $region46: #{tpu_custom_call.1} parent=5 // pred_check_branch
      %277 = sbr.rel (%p275) target = $region48
    $region47: #{tpu_custom_call.1} parent=5 // pred_region
      // Predicated region
      $region49: #{tpu_custom_call.1} parent=47 // pred_check
        %p278 = pneg %p35
      $region50: #{tpu_custom_call.1} parent=47 // pred_check_branch
        %280 = sbr.rel (%p278) target = $region52
      $region51: #{tpu_custom_call.1} parent=47 // pred_region
        %s281 = smul.u32 16, %s15
        %p282 = scmp.lt.s32.totalorder %s281, 63
        %s283 = scalar_select %p282, %s281, 63
        %s284 = smul.addr %s283, 4
        %s285 = scalar_lea.vmem %s0, %s284
        %s286 = smul.u32 16, %s15
      $region52: #{tpu_custom_call.1} parent=47 // pred_fallthru
        _
    $region48: #{tpu_custom_call.1} parent=5 // pred_fallthru
      _
    %p287 = scmp.le.s32.totalorder 1, %s15
    %p288 = scmp.lt.s32.totalorder %s15, 5
    %p289 = pnand %p287, %p288
    %p290 = pneg %p289
    // Predicated region
    $region53: #{tpu_custom_call.1} parent=5 // pred_check
      _
    $region54: #{tpu_custom_call.1} parent=5 // pred_check_branch
      %292 = sbr.rel (%p289) target = $region56
    $region55: #{tpu_custom_call.1} parent=5 // pred_region
      %s293 = ssub.s32 %s15, 1
      %s294 = smul.u32 16, %s20
      %p295 = scmp.lt.s32.totalorder %s294, 63
      %s296 = scalar_select %p295, %s294, 63
      %s297 = smul.addr %s296, 4
      %s298 = scalar_lea.vmem %s0, %s297
      %p299 = pneg %p41
      %p300 = pneg %p38
      %p301 = pneg %p62
      %p302 = pneg %p59
      %p303 = pneg %p83
      %p304 = pneg %p80
      %p305 = pneg %p104
      %p306 = pneg %p101
      %p307 = pneg %p125
      %p308 = pneg %p122
      %p309 = pneg %p146
      %p310 = pneg %p143
      %p311 = pneg %p167
      %p312 = pneg %p164
      %p313 = pneg %p188
      %p314 = pneg %p185
      %p315 = pneg %p209
      %p316 = pneg %p206
      %p317 = pneg %p235
      %p318 = pneg %p232
      %s319 = smul.u32 16, %s20
      %p320 = scmp.lt.s32.totalorder %s319, 63
      %s321 = scalar_select %p320, %s319, 63
      %s322 = smul.addr %s321, 4
      %s323 = scalar_lea.vmem %s9, %s322
      %s324 = smul.u32 16, %s20
      %p325 = scmp.lt.s32.totalorder %s324, 63
      %s326 = scalar_select %p325, %s324, 63
      %s327 = smul.addr %s326, 4
      %s328 = scalar_lea.vmem %s0, %s327
      %s329 = smul.u32 16, %s20
      %s330 = smul.u32 16, %s20
      %p331 = scmp.lt.s32.totalorder %s330, 63
      %s332 = scalar_select %p331, %s330, 63
      %s333 = smul.addr %s332, 4
      %s334 = scalar_lea.vmem %s9, %s333
      %s335 = smul.u32 16, %s20
      %v337 = vld [vmem:[%s328] sm:$0xf]
      %v338 = vld [vmem:[%s328 + $0x4] sm:$0xf]
      %v339 = vld [vmem:[%s328 + $0x8] sm:$0xf]
      %v340 = vld [vmem:[%s328 + $0xc] sm:$0xf]
      %v341 = vld [vmem:[%s328 + $0x10] sm:$0xf]
      %v342 = vld [vmem:[%s328 + $0x14] sm:$0xf]
      %v343 = vld [vmem:[%s328 + $0x18] sm:$0xf]
      %v344 = vld [vmem:[%s328 + $0x1c] sm:$0xf]
      %v345 = vld [vmem:[%s328 + $0x20] sm:$0xf]
      %v346 = vld [vmem:[%s328 + $0x24] sm:$0xf]
      %v347 = vld [vmem:[%s328 + $0x28] sm:$0xf]
      %v348 = vld [vmem:[%s328 + $0x2c] sm:$0xf]
      %v349 = vld [vmem:[%s328 + $0x30] sm:$0xf]
      %v350 = vld [vmem:[%s328 + $0x34] sm:$0xf]
      %v351 = vld [vmem:[%s328 + $0x38] sm:$0xf]
      %v352 = vld [vmem:[%s328 + $0x3c] sm:$0xf]
      %v353 = vld [vmem:[%s1] sm:$0xf]
      %v354 = vld [vmem:[%s2] sm:$0x1]
      %v356 = vperm.slane %v354, 0
      %v374 = vunpack.c.l.b16 %v337
      %v375 = vunpack.c.l.b16 %v338
      %v376 = vunpack.c.l.b16 %v339
      %v377 = vunpack.c.l.b16 %v340
      %v378 = vunpack.c.l.b16 %v341
      %v379 = vunpack.c.l.b16 %v342
      %v380 = vunpack.c.l.b16 %v343
      %v381 = vunpack.c.l.b16 %v344
      %v382 = vunpack.c.l.b16 %v345
      %v383 = vunpack.c.l.b16 %v346
      %v384 = vunpack.c.l.b16 %v347
      %v385 = vunpack.c.l.b16 %v348
      %v386 = vunpack.c.l.b16 %v349
      %v387 = vunpack.c.l.b16 %v350
      %v388 = vunpack.c.l.b16 %v351
      %v389 = vunpack.c.l.b16 %v352
      %v390 = vpack.c.b16 %v375, %v374
      %v391 = vpack.c.b16 %v377, %v376
      %v392 = vpack.c.b16 %v379, %v378
      %v393 = vpack.c.b16 %v381, %v380
      %v394 = vpack.c.b16 %v383, %v382
      %v395 = vpack.c.b16 %v385, %v384
      %v396 = vpack.c.b16 %v387, %v386
      %v397 = vpack.c.b16 %v389, %v388
      %vm398 = vcmask 64512
      %v400 = vsel %vm398, %v390, 0
      %v403 = vsel %vm398, %v391, 0
      %v406 = vsel %vm398, %v392, 0
      %v409 = vsel %vm398, %v393, 0
      %v412 = vsel %vm398, %v394, 0
      %v415 = vsel %vm398, %v395, 0
      %v418 = vsel %vm398, %v396, 0
      %v421 = vsel %vm398, %v397, 0
      %vm423 = vcmask 1043456
      %v425 = vsel %vm423, %v353, 0
      %427 = vmatpush.bf16.msra.mxu0 0
      %428 = vmatpush.bf16.msra.mxu0 0
      %429 = vmatpush.bf16.msra.mxu0 0
      %430 = vmatpush.bf16.msra.mxu0 0
      %431 = vmatpush.bf16.msra.mxu0 0
      %432 = vmatpush.bf16.msra.mxu0 0
      %433 = vmatpush.bf16.msra.mxu0 0
      %434 = vmatpush.bf16.msra.mxu0 %v425
      %435 = vmatmul.bf16.gmra.mxu0 %v400
      %v436 = vpop.f32.mrf.mxu0
      %v437 = vadd.f32 %v356, %v436
      %v438 = vpop.f32.mrf.mxu0
      %v439 = vadd.f32 %v356, %v438
      %440 = vmatmul.bf16.gmra.mxu0 %v403
      %v441 = vpop.f32.mrf.mxu0
      %v442 = vadd.f32 %v356, %v441
      %v443 = vpop.f32.mrf.mxu0
      %v444 = vadd.f32 %v356, %v443
      %445 = vmatmul.bf16.gmra.mxu0 %v406
      %v446 = vpop.f32.mrf.mxu0
      %v447 = vadd.f32 %v356, %v446
      %v448 = vpop.f32.mrf.mxu0
      %v449 = vadd.f32 %v356, %v448
      %450 = vmatmul.bf16.gmra.mxu0 %v409
      %v451 = vpop.f32.mrf.mxu0
      %v452 = vadd.f32 %v356, %v451
      %v453 = vpop.f32.mrf.mxu0
      %v454 = vadd.f32 %v356, %v453
      %455 = vmatmul.bf16.gmra.mxu0 %v412
      %v456 = vpop.f32.mrf.mxu0
      %v457 = vadd.f32 %v356, %v456
      %v458 = vpop.f32.mrf.mxu0
      %v459 = vadd.f32 %v356, %v458
      %460 = vmatmul.bf16.gmra.mxu0 %v415
      %v461 = vpop.f32.mrf.mxu0
      %v462 = vadd.f32 %v356, %v461
      %v463 = vpop.f32.mrf.mxu0
      %v464 = vadd.f32 %v356, %v463
      %465 = vmatmul.bf16.gmra.mxu0 %v418
      %v466 = vpop.f32.mrf.mxu0
      %v467 = vadd.f32 %v356, %v466
      %v468 = vpop.f32.mrf.mxu0
      %v469 = vadd.f32 %v356, %v468
      %470 = vmatmul.bf16.gmra.mxu0 %v421
      %v471 = vpop.f32.mrf.mxu0
      %v472 = vadd.f32 %v356, %v471
      %v473 = vpop.f32.mrf.mxu0
      %v474 = vadd.f32 %v356, %v473
      %475 = vdwg.mxu0
      %v476 = vmax.f32 %v437, 0.0
      %v477 = vmax.f32 %v439, 0.0
      %v478 = vmax.f32 %v442, 0.0
      %v479 = vmax.f32 %v444, 0.0
      %v480 = vmax.f32 %v447, 0.0
      %v481 = vmax.f32 %v449, 0.0
      %v482 = vmax.f32 %v452, 0.0
      %v483 = vmax.f32 %v454, 0.0
      %v484 = vmax.f32 %v457, 0.0
      %v485 = vmax.f32 %v459, 0.0
      %v486 = vmax.f32 %v462, 0.0
      %v487 = vmax.f32 %v464, 0.0
      %v488 = vmax.f32 %v467, 0.0
      %v489 = vmax.f32 %v469, 0.0
      %v490 = vmax.f32 %v472, 0.0
      %v491 = vmax.f32 %v474, 0.0
      %v492 = vpack.c.bf16 %v477, %v476
      %v493 = vpack.c.bf16 %v479, %v478
      %v494 = vpack.c.bf16 %v481, %v480
      %v495 = vpack.c.bf16 %v483, %v482
      %v496 = vpack.c.bf16 %v485, %v484
      %v497 = vpack.c.bf16 %v487, %v486
      %v498 = vpack.c.bf16 %v489, %v488
      %v499 = vpack.c.bf16 %v491, %v490
      %v500 = vld [vmem:[%s3] sm:$0xf]
      %v501 = vld [vmem:[%s3 + $0x4] sm:$0xf]
      %v502 = vld [vmem:[%s3 + $0x8] sm:$0xf]
      %v503 = vld [vmem:[%s3 + $0xc] sm:$0xf]
      %v504 = vld [vmem:[%s3 + $0x10] sm:$0xf]
      %v505 = vld [vmem:[%s3 + $0x14] sm:$0xf]
      %v506 = vld [vmem:[%s3 + $0x18] sm:$0xf]
      %v507 = vld [vmem:[%s3 + $0x1c] sm:$0xf]
      %v508 = vld [vmem:[%s4] sm:$0x1]
      %v510 = vperm.slane %v508, 0
      %v520 = vunpack.c.l.b16 %v500
      %v521 = vunpack.c.l.b16 %v501
      %v522 = vunpack.c.l.b16 %v502
      %v523 = vunpack.c.l.b16 %v503
      %v524 = vunpack.c.l.b16 %v504
      %v525 = vunpack.c.l.b16 %v505
      %v526 = vunpack.c.l.b16 %v506
      %v527 = vunpack.c.l.b16 %v507
      %v528 = vpack.c.b16 %v521, %v520
      %v529 = vpack.c.b16 %v523, %v522
      %v530 = vpack.c.b16 %v525, %v524
      %v531 = vpack.c.b16 %v527, %v526
      %vm536 = vcmask 523264
      %v538 = vsel %vm536, %v492, 0
      %v541 = vsel %vm536, %v493, 0
      %v544 = vsel %vm536, %v494, 0
      %v547 = vsel %vm536, %v495, 0
      %v550 = vsel %vm536, %v496, 0
      %v553 = vsel %vm536, %v497, 0
      %v556 = vsel %vm536, %v498, 0
      %v559 = vsel %vm536, %v499, 0
      %561 = vmatpush.bf16.msra.mxu0 0
      %562 = vmatpush.bf16.msra.mxu0 0
      %563 = vmatpush.bf16.msra.mxu0 0
      %564 = vmatpush.bf16.msra.mxu0 0
      %565 = vmatpush.bf16.msra.mxu0 %v531
      %566 = vmatpush.bf16.msra.mxu0 %v530
      %567 = vmatpush.bf16.msra.mxu0 %v529
      %568 = vmatpush.bf16.msra.mxu0 %v528
      %569 = vmatmul.bf16.gmra.mxu0 %v538
      %v570 = vpop.f32.mrf.mxu0
      %v571 = vadd.f32 %v510, %v570
      %v572 = vpop.f32.mrf.mxu0
      %v573 = vadd.f32 %v510, %v572
      %574 = vmatmul.bf16.gmra.mxu0 %v541
      %v575 = vpop.f32.mrf.mxu0
      %v576 = vadd.f32 %v510, %v575
      %v577 = vpop.f32.mrf.mxu0
      %v578 = vadd.f32 %v510, %v577
      %579 = vmatmul.bf16.gmra.mxu0 %v544
      %v580 = vpop.f32.mrf.mxu0
      %v581 = vadd.f32 %v510, %v580
      %v582 = vpop.f32.mrf.mxu0
      %v583 = vadd.f32 %v510, %v582
      %584 = vmatmul.bf16.gmra.mxu0 %v547
      %v585 = vpop.f32.mrf.mxu0
      %v586 = vadd.f32 %v510, %v585
      %v587 = vpop.f32.mrf.mxu0
      %v588 = vadd.f32 %v510, %v587
      %589 = vmatmul.bf16.gmra.mxu0 %v550
      %v590 = vpop.f32.mrf.mxu0
      %v591 = vadd.f32 %v510, %v590
      %v592 = vpop.f32.mrf.mxu0
      %v593 = vadd.f32 %v510, %v592
      %594 = vmatmul.bf16.gmra.mxu0 %v553
      %v595 = vpop.f32.mrf.mxu0
      %v596 = vadd.f32 %v510, %v595
      %v597 = vpop.f32.mrf.mxu0
      %v598 = vadd.f32 %v510, %v597
      %599 = vmatmul.bf16.gmra.mxu0 %v556
      %v600 = vpop.f32.mrf.mxu0
      %v601 = vadd.f32 %v510, %v600
      %v602 = vpop.f32.mrf.mxu0
      %v603 = vadd.f32 %v510, %v602
      %604 = vmatmul.bf16.gmra.mxu0 %v559
      %v605 = vpop.f32.mrf.mxu0
      %v606 = vadd.f32 %v510, %v605
      %v607 = vpop.f32.mrf.mxu0
      %v608 = vadd.f32 %v510, %v607
      %609 = vdwg.mxu0
      %v610 = vmax.f32 %v571, 0.0
      %v611 = vmax.f32 %v573, 0.0
      %v612 = vmax.f32 %v576, 0.0
      %v613 = vmax.f32 %v578, 0.0
      %v614 = vmax.f32 %v581, 0.0
      %v615 = vmax.f32 %v583, 0.0
      %v616 = vmax.f32 %v586, 0.0
      %v617 = vmax.f32 %v588, 0.0
      %v618 = vmax.f32 %v591, 0.0
      %v619 = vmax.f32 %v593, 0.0
      %v620 = vmax.f32 %v596, 0.0
      %v621 = vmax.f32 %v598, 0.0
      %v622 = vmax.f32 %v601, 0.0
      %v623 = vmax.f32 %v603, 0.0
      %v624 = vmax.f32 %v606, 0.0
      %v625 = vmax.f32 %v608, 0.0
      %v626 = vpack.c.bf16 %v611, %v610
      %v627 = vpack.c.bf16 %v613, %v612
      %v628 = vpack.c.bf16 %v615, %v614
      %v629 = vpack.c.bf16 %v617, %v616
      %v630 = vpack.c.bf16 %v619, %v618
      %v631 = vpack.c.bf16 %v621, %v620
      %v632 = vpack.c.bf16 %v623, %v622
      %v633 = vpack.c.bf16 %v625, %v624
      %v634 = vld [vmem:[%s5] sm:$0xff]
      %v635 = vld [vmem:[%s5 + $0x8] sm:$0xff]
      %v636 = vld [vmem:[%s5 + $0x10] sm:$0xff]
      %v637 = vld [vmem:[%s5 + $0x18] sm:$0xff]
      %v638 = vld [vmem:[%s5 + $0x20] sm:$0xff]
      %v639 = vld [vmem:[%s5 + $0x28] sm:$0xff]
      %v640 = vld [vmem:[%s5 + $0x30] sm:$0xff]
      %v641 = vld [vmem:[%s5 + $0x38] sm:$0xff]
      %v642 = vld [vmem:[%s5 + $0x40] sm:$0xff]
      %v643 = vld [vmem:[%s5 + $0x48] sm:$0xff]
      %v644 = vld [vmem:[%s5 + $0x50] sm:$0xff]
      %v645 = vld [vmem:[%s5 + $0x58] sm:$0xff]
      %v646 = vld [vmem:[%s5 + $0x60] sm:$0xff]
      %v647 = vld [vmem:[%s5 + $0x68] sm:$0xff]
      %v648 = vld [vmem:[%s5 + $0x70] sm:$0xff]
      %v649 = vld [vmem:[%s5 + $0x78] sm:$0xff]
      %v650 = vld [vmem:[%s6] sm:$0x3]
      %v652 = vperm.slane %v650, 0
      %v653 = vperm.slane %v650, 1
      %v672 = vunpack.c.l.b16 %v634
      %v673 = vunpack.c.h.b16 %v634
      %v674 = vunpack.c.l.b16 %v635
      %v675 = vunpack.c.h.b16 %v635
      %v676 = vunpack.c.l.b16 %v636
      %v677 = vunpack.c.h.b16 %v636
      %v678 = vunpack.c.l.b16 %v637
      %v679 = vunpack.c.h.b16 %v637
      %v680 = vunpack.c.l.b16 %v638
      %v681 = vunpack.c.h.b16 %v638
      %v682 = vunpack.c.l.b16 %v639
      %v683 = vunpack.c.h.b16 %v639
      %v684 = vunpack.c.l.b16 %v640
      %v685 = vunpack.c.h.b16 %v640
      %v686 = vunpack.c.l.b16 %v641
      %v687 = vunpack.c.h.b16 %v641
      %v688 = vunpack.c.l.b16 %v642
      %v689 = vunpack.c.h.b16 %v642
      %v690 = vunpack.c.l.b16 %v643
      %v691 = vunpack.c.h.b16 %v643
      %v692 = vunpack.c.l.b16 %v644
      %v693 = vunpack.c.h.b16 %v644
      %v694 = vunpack.c.l.b16 %v645
      %v695 = vunpack.c.h.b16 %v645
      %v696 = vunpack.c.l.b16 %v646
      %v697 = vunpack.c.h.b16 %v646
      %v698 = vunpack.c.l.b16 %v647
      %v699 = vunpack.c.h.b16 %v647
      %v700 = vunpack.c.l.b16 %v648
      %v701 = vunpack.c.h.b16 %v648
      %v702 = vunpack.c.l.b16 %v649
      %v703 = vunpack.c.h.b16 %v649
      %v704 = vpack.c.b16 %v674, %v672
      %v705 = vpack.c.b16 %v675, %v673
      %v706 = vpack.c.b16 %v678, %v676
      %v707 = vpack.c.b16 %v679, %v677
      %v708 = vpack.c.b16 %v682, %v680
      %v709 = vpack.c.b16 %v683, %v681
      %v710 = vpack.c.b16 %v686, %v684
      %v711 = vpack.c.b16 %v687, %v685
      %v712 = vpack.c.b16 %v690, %v688
      %v713 = vpack.c.b16 %v691, %v689
      %v714 = vpack.c.b16 %v694, %v692
      %v715 = vpack.c.b16 %v695, %v693
      %v716 = vpack.c.b16 %v698, %v696
      %v717 = vpack.c.b16 %v699, %v697
      %v718 = vpack.c.b16 %v702, %v700
      %v719 = vpack.c.b16 %v703, %v701
      %736 = vmatpush.bf16.msra.mxu0 %v718
      %737 = vmatpush.bf16.msra.mxu0 %v716
      %738 = vmatpush.bf16.msra.mxu0 %v714
      %739 = vmatpush.bf16.msra.mxu0 %v712
      %740 = vmatpush.bf16.msra.mxu0 %v710
      %741 = vmatpush.bf16.msra.mxu0 %v708
      %742 = vmatpush.bf16.msra.mxu0 %v706
      %743 = vmatpush.bf16.msra.mxu0 %v704
      %744 = vmatmul.bf16.gmra.mxu0 %v626
      %v745 = vpop.f32.mrf.mxu0
      %v746 = vadd.f32 %v652, %v745
      %v747 = vpop.f32.mrf.mxu0
      %v748 = vadd.f32 %v652, %v747
      %749 = vmatmul.bf16.gmra.mxu0 %v627
      %v750 = vpop.f32.mrf.mxu0
      %v751 = vadd.f32 %v652, %v750
      %v752 = vpop.f32.mrf.mxu0
      %v753 = vadd.f32 %v652, %v752
      %754 = vmatmul.bf16.gmra.mxu0 %v628
      %v755 = vpop.f32.mrf.mxu0
      %v756 = vadd.f32 %v652, %v755
      %v757 = vpop.f32.mrf.mxu0
      %v758 = vadd.f32 %v652, %v757
      %759 = vmatmul.bf16.gmra.mxu0 %v629
      %v760 = vpop.f32.mrf.mxu0
      %v761 = vadd.f32 %v652, %v760
      %v762 = vpop.f32.mrf.mxu0
      %v763 = vadd.f32 %v652, %v762
      %764 = vmatmul.bf16.gmra.mxu0 %v630
      %v765 = vpop.f32.mrf.mxu0
      %v766 = vadd.f32 %v652, %v765
      %v767 = vpop.f32.mrf.mxu0
      %v768 = vadd.f32 %v652, %v767
      %769 = vmatmul.bf16.gmra.mxu0 %v631
      %v770 = vpop.f32.mrf.mxu0
      %v771 = vadd.f32 %v652, %v770
      %v772 = vpop.f32.mrf.mxu0
      %v773 = vadd.f32 %v652, %v772
      %774 = vmatmul.bf16.gmra.mxu0 %v632
      %v775 = vpop.f32.mrf.mxu0
      %v776 = vadd.f32 %v652, %v775
      %v777 = vpop.f32.mrf.mxu0
      %v778 = vadd.f32 %v652, %v777
      %779 = vmatmul.bf16.gmra.mxu0 %v633
      %v780 = vpop.f32.mrf.mxu0
      %v781 = vadd.f32 %v652, %v780
      %v782 = vpop.f32.mrf.mxu0
      %v783 = vadd.f32 %v652, %v782
      %784 = vdwg.mxu0
      %785 = vmatpush.bf16.msra.mxu0 %v719
      %786 = vmatpush.bf16.msra.mxu0 %v717
      %787 = vmatpush.bf16.msra.mxu0 %v715
      %788 = vmatpush.bf16.msra.mxu0 %v713
      %789 = vmatpush.bf16.msra.mxu0 %v711
      %790 = vmatpush.bf16.msra.mxu0 %v709
      %791 = vmatpush.bf16.msra.mxu0 %v707
      %792 = vmatpush.bf16.msra.mxu0 %v705
      %793 = vmatmul.bf16.gmra.mxu0 %v626
      %v794 = vpop.f32.mrf.mxu0
      %v795 = vadd.f32 %v653, %v794
      %v796 = vpop.f32.mrf.mxu0
      %v797 = vadd.f32 %v653, %v796
      %798 = vmatmul.bf16.gmra.mxu0 %v627
      %v799 = vpop.f32.mrf.mxu0
      %v800 = vadd.f32 %v653, %v799
      %v801 = vpop.f32.mrf.mxu0
      %v802 = vadd.f32 %v653, %v801
      %803 = vmatmul.bf16.gmra.mxu0 %v628
      %v804 = vpop.f32.mrf.mxu0
      %v805 = vadd.f32 %v653, %v804
      %v806 = vpop.f32.mrf.mxu0
      %v807 = vadd.f32 %v653, %v806
      %808 = vmatmul.bf16.gmra.mxu0 %v629
      %v809 = vpop.f32.mrf.mxu0
      %v810 = vadd.f32 %v653, %v809
      %v811 = vpop.f32.mrf.mxu0
      %v812 = vadd.f32 %v653, %v811
      %813 = vmatmul.bf16.gmra.mxu0 %v630
      %v814 = vpop.f32.mrf.mxu0
      %v815 = vadd.f32 %v653, %v814
      %v816 = vpop.f32.mrf.mxu0
      %v817 = vadd.f32 %v653, %v816
      %818 = vmatmul.bf16.gmra.mxu0 %v631
      %v819 = vpop.f32.mrf.mxu0
      %v820 = vadd.f32 %v653, %v819
      %v821 = vpop.f32.mrf.mxu0
      %v822 = vadd.f32 %v653, %v821
      %823 = vmatmul.bf16.gmra.mxu0 %v632
      %v824 = vpop.f32.mrf.mxu0
      %v825 = vadd.f32 %v653, %v824
      %v826 = vpop.f32.mrf.mxu0
      %v827 = vadd.f32 %v653, %v826
      %828 = vmatmul.bf16.gmra.mxu0 %v633
      %v829 = vpop.f32.mrf.mxu0
      %v830 = vadd.f32 %v653, %v829
      %v831 = vpop.f32.mrf.mxu0
      %v832 = vadd.f32 %v653, %v831
      %833 = vdwg.mxu0
      %v834 = vmax.f32 %v746, 0.0
      %v835 = vmax.f32 %v795, 0.0
      %v836 = vmax.f32 %v748, 0.0
      %v837 = vmax.f32 %v797, 0.0
      %v838 = vmax.f32 %v751, 0.0
      %v839 = vmax.f32 %v800, 0.0
      %v840 = vmax.f32 %v753, 0.0
      %v841 = vmax.f32 %v802, 0.0
      %v842 = vmax.f32 %v756, 0.0
      %v843 = vmax.f32 %v805, 0.0
      %v844 = vmax.f32 %v758, 0.0
      %v845 = vmax.f32 %v807, 0.0
      %v846 = vmax.f32 %v761, 0.0
      %v847 = vmax.f32 %v810, 0.0
      %v848 = vmax.f32 %v763, 0.0
      %v849 = vmax.f32 %v812, 0.0
      %v850 = vmax.f32 %v766, 0.0
      %v851 = vmax.f32 %v815, 0.0
      %v852 = vmax.f32 %v768, 0.0
      %v853 = vmax.f32 %v817, 0.0
      %v854 = vmax.f32 %v771, 0.0
      %v855 = vmax.f32 %v820, 0.0
      %v856 = vmax.f32 %v773, 0.0
      %v857 = vmax.f32 %v822, 0.0
      %v858 = vmax.f32 %v776, 0.0
      %v859 = vmax.f32 %v825, 0.0
      %v860 = vmax.f32 %v778, 0.0
      %v861 = vmax.f32 %v827, 0.0
      %v862 = vmax.f32 %v781, 0.0
      %v863 = vmax.f32 %v830, 0.0
      %v864 = vmax.f32 %v783, 0.0
      %v865 = vmax.f32 %v832, 0.0
      %v866 = vpack.c.bf16 %v836, %v834
      %v867 = vpack.c.bf16 %v837, %v835
      %v868 = vpack.c.bf16 %v840, %v838
      %v869 = vpack.c.bf16 %v841, %v839
      %v870 = vpack.c.bf16 %v844, %v842
      %v871 = vpack.c.bf16 %v845, %v843
      %v872 = vpack.c.bf16 %v848, %v846
      %v873 = vpack.c.bf16 %v849, %v847
      %v874 = vpack.c.bf16 %v852, %v850
      %v875 = vpack.c.bf16 %v853, %v851
      %v876 = vpack.c.bf16 %v856, %v854
      %v877 = vpack.c.bf16 %v857, %v855
      %v878 = vpack.c.bf16 %v860, %v858
      %v879 = vpack.c.bf16 %v861, %v859
      %v880 = vpack.c.bf16 %v864, %v862
      %v881 = vpack.c.bf16 %v865, %v863
      %v882 = vld [vmem:[%s7] sm:$0xf]
      %v883 = vld [vmem:[%s7 + $0x4] sm:$0xf]
      %v884 = vld [vmem:[%s7 + $0x8] sm:$0xf]
      %v885 = vld [vmem:[%s7 + $0xc] sm:$0xf]
      %v886 = vld [vmem:[%s7 + $0x10] sm:$0xf]
      %v887 = vld [vmem:[%s7 + $0x14] sm:$0xf]
      %v888 = vld [vmem:[%s7 + $0x18] sm:$0xf]
      %v889 = vld [vmem:[%s7 + $0x1c] sm:$0xf]
      %v890 = vld [vmem:[%s7 + $0x20] sm:$0xf]
      %v891 = vld [vmem:[%s7 + $0x24] sm:$0xf]
      %v892 = vld [vmem:[%s7 + $0x28] sm:$0xf]
      %v893 = vld [vmem:[%s7 + $0x2c] sm:$0xf]
      %v894 = vld [vmem:[%s7 + $0x30] sm:$0xf]
      %v895 = vld [vmem:[%s7 + $0x34] sm:$0xf]
      %v896 = vld [vmem:[%s7 + $0x38] sm:$0xf]
      %v897 = vld [vmem:[%s7 + $0x3c] sm:$0xf]
      %v898 = vld [vmem:[%s7 + $0x40] sm:$0xf]
      %v899 = vld [vmem:[%s7 + $0x44] sm:$0xf]
      %v900 = vld [vmem:[%s7 + $0x48] sm:$0xf]
      %v901 = vld [vmem:[%s7 + $0x4c] sm:$0xf]
      %v902 = vld [vmem:[%s7 + $0x50] sm:$0xf]
      %v903 = vld [vmem:[%s7 + $0x54] sm:$0xf]
      %v904 = vld [vmem:[%s7 + $0x58] sm:$0xf]
      %v905 = vld [vmem:[%s7 + $0x5c] sm:$0xf]
      %v906 = vld [vmem:[%s7 + $0x60] sm:$0xf]
      %v907 = vld [vmem:[%s7 + $0x64] sm:$0xf]
      %v908 = vld [vmem:[%s7 + $0x68] sm:$0xf]
      %v909 = vld [vmem:[%s7 + $0x6c] sm:$0xf]
      %v910 = vld [vmem:[%s7 + $0x70] sm:$0xf]
      %v911 = vld [vmem:[%s7 + $0x74] sm:$0xf]
      %v912 = vld [vmem:[%s7 + $0x78] sm:$0xf]
      %v913 = vld [vmem:[%s7 + $0x7c] sm:$0xf]
      %v914 = vld [vmem:[%s8] sm:$0x1]
      %v916 = vperm.slane %v914, 0
      %v950 = vunpack.c.l.b16 %v882
      %v951 = vunpack.c.l.b16 %v883
      %v952 = vunpack.c.l.b16 %v884
      %v953 = vunpack.c.l.b16 %v885
      %v954 = vunpack.c.l.b16 %v886
      %v955 = vunpack.c.l.b16 %v887
      %v956 = vunpack.c.l.b16 %v888
      %v957 = vunpack.c.l.b16 %v889
      %v958 = vunpack.c.l.b16 %v890
      %v959 = vunpack.c.l.b16 %v891
      %v960 = vunpack.c.l.b16 %v892
      %v961 = vunpack.c.l.b16 %v893
      %v962 = vunpack.c.l.b16 %v894
      %v963 = vunpack.c.l.b16 %v895
      %v964 = vunpack.c.l.b16 %v896
      %v965 = vunpack.c.l.b16 %v897
      %v966 = vunpack.c.l.b16 %v898
      %v967 = vunpack.c.l.b16 %v899
      %v968 = vunpack.c.l.b16 %v900
      %v969 = vunpack.c.l.b16 %v901
      %v970 = vunpack.c.l.b16 %v902
      %v971 = vunpack.c.l.b16 %v903
      %v972 = vunpack.c.l.b16 %v904
      %v973 = vunpack.c.l.b16 %v905
      %v974 = vunpack.c.l.b16 %v906
      %v975 = vunpack.c.l.b16 %v907
      %v976 = vunpack.c.l.b16 %v908
      %v977 = vunpack.c.l.b16 %v909
      %v978 = vunpack.c.l.b16 %v910
      %v979 = vunpack.c.l.b16 %v911
      %v980 = vunpack.c.l.b16 %v912
      %v981 = vunpack.c.l.b16 %v913
      %v982 = vpack.c.b16 %v951, %v950
      %v983 = vpack.c.b16 %v953, %v952
      %v984 = vpack.c.b16 %v955, %v954
      %v985 = vpack.c.b16 %v957, %v956
      %v986 = vpack.c.b16 %v959, %v958
      %v987 = vpack.c.b16 %v961, %v960
      %v988 = vpack.c.b16 %v963, %v962
      %v989 = vpack.c.b16 %v965, %v964
      %v990 = vpack.c.b16 %v967, %v966
      %v991 = vpack.c.b16 %v969, %v968
      %v992 = vpack.c.b16 %v971, %v970
      %v993 = vpack.c.b16 %v973, %v972
      %v994 = vpack.c.b16 %v975, %v974
      %v995 = vpack.c.b16 %v977, %v976
      %v996 = vpack.c.b16 %v979, %v978
      %v997 = vpack.c.b16 %v981, %v980
      %1014 = vmatpush.bf16.msra.mxu0 %v989
      %1015 = vmatpush.bf16.msra.mxu0 %v988
      %1016 = vmatpush.bf16.msra.mxu0 %v987
      %1017 = vmatpush.bf16.msra.mxu0 %v986
      %1018 = vmatpush.bf16.msra.mxu0 %v985
      %1019 = vmatpush.bf16.msra.mxu0 %v984
      %1020 = vmatpush.bf16.msra.mxu0 %v983
      %1021 = vmatpush.bf16.msra.mxu0 %v982
      %1022 = vmatmul.bf16.gmra.mxu0 %v866
      %v1023 = vpop.f32.mrf.mxu0
      %v1024 = vadd.f32 %v916, %v1023
      %v1025 = vpop.f32.mrf.mxu0
      %v1026 = vadd.f32 %v916, %v1025
      %1027 = vmatmul.bf16.gmra.mxu0 %v868
      %v1028 = vpop.f32.mrf.mxu0
      %v1029 = vadd.f32 %v916, %v1028
      %v1030 = vpop.f32.mrf.mxu0
      %v1031 = vadd.f32 %v916, %v1030
      %1032 = vmatmul.bf16.gmra.mxu0 %v870
      %v1033 = vpop.f32.mrf.mxu0
      %v1034 = vadd.f32 %v916, %v1033
      %v1035 = vpop.f32.mrf.mxu0
      %v1036 = vadd.f32 %v916, %v1035
      %1037 = vmatmul.bf16.gmra.mxu0 %v872
      %v1038 = vpop.f32.mrf.mxu0
      %v1039 = vadd.f32 %v916, %v1038
      %v1040 = vpop.f32.mrf.mxu0
      %v1041 = vadd.f32 %v916, %v1040
      %1042 = vmatmul.bf16.gmra.mxu0 %v874
      %v1043 = vpop.f32.mrf.mxu0
      %v1044 = vadd.f32 %v916, %v1043
      %v1045 = vpop.f32.mrf.mxu0
      %v1046 = vadd.f32 %v916, %v1045
      %1047 = vmatmul.bf16.gmra.mxu0 %v876
      %v1048 = vpop.f32.mrf.mxu0
      %v1049 = vadd.f32 %v916, %v1048
      %v1050 = vpop.f32.mrf.mxu0
      %v1051 = vadd.f32 %v916, %v1050
      %1052 = vmatmul.bf16.gmra.mxu0 %v878
      %v1053 = vpop.f32.mrf.mxu0
      %v1054 = vadd.f32 %v916, %v1053
      %v1055 = vpop.f32.mrf.mxu0
      %v1056 = vadd.f32 %v916, %v1055
      %1057 = vmatmul.bf16.gmra.mxu0 %v880
      %v1058 = vpop.f32.mrf.mxu0
      %v1059 = vadd.f32 %v916, %v1058
      %v1060 = vpop.f32.mrf.mxu0
      %v1061 = vadd.f32 %v916, %v1060
      %1062 = vdwg.mxu0
      %1063 = vmatpush.bf16.msra.mxu0 %v997
      %1064 = vmatpush.bf16.msra.mxu0 %v996
      %1065 = vmatpush.bf16.msra.mxu0 %v995
      %1066 = vmatpush.bf16.msra.mxu0 %v994
      %1067 = vmatpush.bf16.msra.mxu0 %v993
      %1068 = vmatpush.bf16.msra.mxu0 %v992
      %1069 = vmatpush.bf16.msra.mxu0 %v991
      %1070 = vmatpush.bf16.msra.mxu0 %v990
      %1071 = vmatmul.bf16.gmra.mxu0 %v867
      %v1072 = vpop.f32.mrf.mxu0
      %v1073 = vadd.f32 %v1024, %v1072
      %v1074 = vpop.f32.mrf.mxu0
      %v1075 = vadd.f32 %v1026, %v1074
      %1076 = vmatmul.bf16.gmra.mxu0 %v869
      %v1077 = vpop.f32.mrf.mxu0
      %v1078 = vadd.f32 %v1029, %v1077
      %v1079 = vpop.f32.mrf.mxu0
      %v1080 = vadd.f32 %v1031, %v1079
      %1081 = vmatmul.bf16.gmra.mxu0 %v871
      %v1082 = vpop.f32.mrf.mxu0
      %v1083 = vadd.f32 %v1034, %v1082
      %v1084 = vpop.f32.mrf.mxu0
      %v1085 = vadd.f32 %v1036, %v1084
      %1086 = vmatmul.bf16.gmra.mxu0 %v873
      %v1087 = vpop.f32.mrf.mxu0
      %v1088 = vadd.f32 %v1039, %v1087
      %v1089 = vpop.f32.mrf.mxu0
      %v1090 = vadd.f32 %v1041, %v1089
      %1091 = vmatmul.bf16.gmra.mxu0 %v875
      %v1092 = vpop.f32.mrf.mxu0
      %v1093 = vadd.f32 %v1044, %v1092
      %v1094 = vpop.f32.mrf.mxu0
      %v1095 = vadd.f32 %v1046, %v1094
      %1096 = vmatmul.bf16.gmra.mxu0 %v877
      %v1097 = vpop.f32.mrf.mxu0
      %v1098 = vadd.f32 %v1049, %v1097
      %v1099 = vpop.f32.mrf.mxu0
      %v1100 = vadd.f32 %v1051, %v1099
      %1101 = vmatmul.bf16.gmra.mxu0 %v879
      %v1102 = vpop.f32.mrf.mxu0
      %v1103 = vadd.f32 %v1054, %v1102
      %v1104 = vpop.f32.mrf.mxu0
      %v1105 = vadd.f32 %v1056, %v1104
      %1106 = vmatmul.bf16.gmra.mxu0 %v881
      %v1107 = vpop.f32.mrf.mxu0
      %v1108 = vadd.f32 %v1059, %v1107
      %v1109 = vpop.f32.mrf.mxu0
      %v1110 = vadd.f32 %v1061, %v1109
      %1111 = vdwg.mxu0
      %v1112 = vpack.c.bf16 %v1073, %v1073
      %v1113 = vpack.c.bf16 %v1075, %v1075
      %v1114 = vpack.c.bf16 %v1078, %v1078
      %v1115 = vpack.c.bf16 %v1080, %v1080
      %v1116 = vpack.c.bf16 %v1083, %v1083
      %v1117 = vpack.c.bf16 %v1085, %v1085
      %v1118 = vpack.c.bf16 %v1088, %v1088
      %v1119 = vpack.c.bf16 %v1090, %v1090
      %v1120 = vpack.c.bf16 %v1093, %v1093
      %v1121 = vpack.c.bf16 %v1095, %v1095
      %v1122 = vpack.c.bf16 %v1098, %v1098
      %v1123 = vpack.c.bf16 %v1100, %v1100
      %v1124 = vpack.c.bf16 %v1103, %v1103
      %v1125 = vpack.c.bf16 %v1105, %v1105
      %v1126 = vpack.c.bf16 %v1108, %v1108
      %v1127 = vpack.c.bf16 %v1110, %v1110
      %vm1128 = vcmask 519168
      %1129 = vst.msk [vmem:[%s334] sm:$0xf] %vm1128, %v1112
      %1130 = vst.msk [vmem:[%s334 + $0x4] sm:$0xf] %vm1128, %v1113
      %1131 = vst.msk [vmem:[%s334 + $0x8] sm:$0xf] %vm1128, %v1114
      %1132 = vst.msk [vmem:[%s334 + $0xc] sm:$0xf] %vm1128, %v1115
      %1133 = vst.msk [vmem:[%s334 + $0x10] sm:$0xf] %vm1128, %v1116
      %1134 = vst.msk [vmem:[%s334 + $0x14] sm:$0xf] %vm1128, %v1117
      %1135 = vst.msk [vmem:[%s334 + $0x18] sm:$0xf] %vm1128, %v1118
      %1136 = vst.msk [vmem:[%s334 + $0x1c] sm:$0xf] %vm1128, %v1119
      %1137 = vst.msk [vmem:[%s334 + $0x20] sm:$0xf] %vm1128, %v1120
      %1138 = vst.msk [vmem:[%s334 + $0x24] sm:$0xf] %vm1128, %v1121
      %1139 = vst.msk [vmem:[%s334 + $0x28] sm:$0xf] %vm1128, %v1122
      %1140 = vst.msk [vmem:[%s334 + $0x2c] sm:$0xf] %vm1128, %v1123
      %1141 = vst.msk [vmem:[%s334 + $0x30] sm:$0xf] %vm1128, %v1124
      %1142 = vst.msk [vmem:[%s334 + $0x34] sm:$0xf] %vm1128, %v1125
      %1143 = vst.msk [vmem:[%s334 + $0x38] sm:$0xf] %vm1128, %v1126
      %1144 = vst.msk [vmem:[%s334 + $0x3c] sm:$0xf] %vm1128, %v1127
      %s1145 = smul.u32 16, %s20
      %p1146 = scmp.lt.s32.totalorder %s1145, 63
      %s1147 = scalar_select %p1146, %s1145, 63
      %s1148 = smul.addr %s1147, 4
      %s1149 = scalar_lea.vmem %s9, %s1148
      // Predicated region
      $region57: #{tpu_custom_call.1} parent=55 // pred_check
        %p1150 = pneg %p232
      $region58: #{tpu_custom_call.1} parent=55 // pred_check_branch
        %1152 = sbr.rel (%p1150) target = $region60
      $region59: #{tpu_custom_call.1} parent=55 // pred_region
        %s1153 = smul.u32 16, %s20
      $region60: #{tpu_custom_call.1} parent=55 // pred_fallthru
        _
    $region56: #{tpu_custom_call.1} parent=5 // pred_fallthru
      _
    %p1154 = scmp.le.s32.totalorder 2, %s15
    // Predicated region
    $region61: #{tpu_custom_call.1} parent=5 // pred_check
      %p1155 = pneg %p1154
    $region62: #{tpu_custom_call.1} parent=5 // pred_check_branch
      %1157 = sbr.rel (%p1155) target = $region64
    $region63: #{tpu_custom_call.1} parent=5 // pred_region
      %s1158 = ssub.s32 %s15, 2
      // Predicated region
      $region65: #{tpu_custom_call.1} parent=63 // pred_check
        %p1159 = pneg %p238
      $region66: #{tpu_custom_call.1} parent=63 // pred_check_branch
        %1161 = sbr.rel (%p1159) target = $region68
      $region67: #{tpu_custom_call.1} parent=63 // pred_region
        %s1162 = smul.u32 16, %s21
        %p1163 = scmp.lt.s32.totalorder %s1162, 63
        %s1164 = scalar_select %p1163, %s1162, 63
        %s1165 = smul.addr %s1164, 4
        %s1166 = scalar_lea.vmem %s9, %s1165
      $region68: #{tpu_custom_call.1} parent=63 // pred_fallthru
        _
    $region64: #{tpu_custom_call.1} parent=5 // pred_fallthru
      _
  $region6: #{tpu_custom_call.1} parent=0 // loop_footer
    %s19 = sadd.s32 1, %s15
  $region7: #{tpu_custom_call.1} parent=0 // loop_footer_branch
    %14 = sbr.rel target = $region3
  $region8: #{tpu_custom_call.1} parent=0 // loop_exit
    _

</llo_original>
